<compile_context>
chip_gen: v7x
topology: tpu7x:2x2x1
jax: 0.10.0
libtpu: 0.0.40
codegen_flags: <defaults>
</compile_context>

<pallas_src>
import functools

import jax
import jax.numpy as jnp
from jax.experimental import pallas as pl
from jax.experimental.pallas import tpu as pltpu


def _bpr_loss_kernel(x_ref, diag_ref, out_ref, *, tile_m, n, need_mask):
    i = pl.program_id(0)

    # Full-width row block of logits; upcast on the resident VMEM tile.
    x = x_ref[...].astype(jnp.float32)                       # (tile_m, n)

    # Matching slice of the resident diagonal (already f32, zero-padded).
    start = pl.multiple_of(i * tile_m, 8)
    d = diag_ref[pl.ds(start, tile_m), :]                    # (tile_m, 1)

    # diff[r, j] = logit[r, r] - logit[r, j]
    diff = d - x

    # Numerically-stable logsigmoid(d) = min(d, 0) - log1p(exp(-|d|))
    logsig = jnp.minimum(diff, 0.0) - jnp.log1p(jnp.exp(-jnp.abs(diff)))

    if need_mask:
        # Only traced when the last row-block is ragged: zero out padded rows.
        # Keep the select AFTER the transcendentals so garbage/NaN from padded
        # rows cannot propagate.
        row_ids = jax.lax.broadcasted_iota(jnp.int32, (tile_m, 1), 0) + i * tile_m
        logsig = jnp.where(row_ids < n, logsig, 0.0)

    # Per-block partial sums, keeping the 128-lane axis (cheap sublane reduce,
    # lane-dense store). Final reduce happens in the wrapper.
    out_ref[...] = jnp.sum(logsig, axis=0, keepdims=True).reshape(1, 1, n)


def _round_up(x: int, m: int) -> int:
    return (x + m - 1) // m * m


def _pick_tile_m(n: int) -> int:
    """Largest row-block (multiple of 8, <=512) such that one (tile_m, n) f32
    intermediate stays <= 6 MiB; with double-buffered input plus a few live
    f32 temporaries this stays well inside a 48 MiB scoped-VMEM budget on all
    of v5e/v6e/v7x."""
    f32_tile_budget = 6 * 1024 * 1024
    tile = f32_tile_budget // (n * 4)
    tile = max(8, min(512, (tile // 8) * 8))
    return min(tile, _round_up(n, 8))


def bpr_loss_pallas(logit: jax.Array) -> jax.Array:
    """Pallas implementation of BPRLoss.forward. Returns a scalar float32."""
    assert logit.ndim == 2 and logit.shape[0] == logit.shape[1], "logit must be square"
    n = logit.shape[0]

    tile_m = _pick_tile_m(n)
    num_blocks = pl.cdiv(n, tile_m)
    need_mask = (n % tile_m) != 0
    n_pad = num_blocks * tile_m

    # Diagonal via explicit strided slice: O(N) bytes, never a full-matrix pass.
    diag = logit.reshape(-1)[:: n + 1].astype(jnp.float32).reshape(n, 1)
    if n_pad != n:
        diag = jnp.pad(diag, ((0, n_pad - n), (0, 0)))

    kernel = functools.partial(
        _bpr_loss_kernel, tile_m=tile_m, n=n, need_mask=need_mask
    )

    partials = pl.pallas_call(
        kernel,
        out_shape=jax.ShapeDtypeStruct((num_blocks, 1, n), jnp.float32),
        grid_spec=pltpu.PrefetchScalarGridSpec(
            num_scalar_prefetch=0,
            grid=(num_blocks,),
            in_specs=[
                # Streamed full-width row block of logit (native dtype).
                pl.BlockSpec((tile_m, n), lambda i: (i, 0)),
                # Resident diagonal: fetched once, sliced in-kernel.
                pl.BlockSpec((n_pad, 1), lambda i: (0, 0)),
            ],
            # Per-block lane-dense partial sums -> no cross-step dependency.
            out_specs=pl.BlockSpec((1, 1, n), lambda i: (i, 0, 0)),
        ),
        compiler_params=pltpu.CompilerParams(
            dimension_semantics=("parallel",),   # row blocks are independent
            vmem_limit_bytes=48 * 1024 * 1024,
        ),
    )(logit, diag)

    # Tiny final reduce + scale in XLA.
    return -jnp.sum(partials, dtype=jnp.float32) / float(n * n)


def _bpr_loss_ref(logit: jax.Array) -> jax.Array:
    # Pure-JAX reference (also used as the tiny-N fast path).
    logit = logit.astype(jnp.float32)
    diag = jnp.diag(logit)[:, None]
    diff = diag - logit
    return -jnp.mean(jax.nn.log_sigmoid(diff))


def bpr_loss(logit: jax.Array, *, min_kernel_n: int = 512) -> jax.Array:
    """Dispatcher: tiny matrices aren't worth a kernel launch; large ones stream
    through the tiled Pallas kernel."""
    n = logit.shape[0]
    if n < min_kernel_n:
        return _bpr_loss_ref(logit)
    return bpr_loss_pallas(logit)


if __name__ == "__main__":
    key = jax.random.PRNGKey(0)

    # Exercise the kernel: tiny (single 8x8 block), single full block (128),
    # and multi-block with a ragged last block (640 -> blocks of 512).
    for n in (8, 128, 640):
        k = jax.random.fold_in(key, n)
        logit = jax.random.normal(k, (n, n), dtype=jnp.float32)
        got = jax.block_until_ready(bpr_loss_pallas(logit))
        ref = jax.block_until_ready(_bpr_loss_ref(logit))
        assert jnp.allclose(got, ref, rtol=1e-4, atol=1e-5), (n, got, ref)

    # bf16 streaming path: half the HBM bytes, math still f32 in-kernel.
    k = jax.random.fold_in(key, 999)
    logit_bf16 = jax.random.normal(k, (256, 256), dtype=jnp.float32).astype(jnp.bfloat16)
    got_bf = jax.block_until_ready(bpr_loss_pallas(logit_bf16))
    ref_bf = jax.block_until_ready(_bpr_loss_ref(logit_bf16.astype(jnp.float32)))
    assert jnp.allclose(got_bf, ref_bf, rtol=1e-4, atol=1e-5), (got_bf, ref_bf)

    # Dispatcher fast path for tiny N.
    logit_small = jax.random.normal(key, (8, 8), dtype=jnp.float32)
    got_small = jax.block_until_ready(bpr_loss(logit_small))
    ref_small = jax.block_until_ready(_bpr_loss_ref(logit_small))
    assert jnp.allclose(got_small, ref_small, rtol=1e-5, atol=1e-5), (got_small, ref_small)

    print("KERNEL_OK")
</pallas_src>

<mosaic_0001>
module attributes {stable_mosaic.version = 11 : i64} {
  func.func @_bpr_loss_kernel(%arg0: i32, %arg1: memref<8x8xf32, #tpu.memory_space<vmem>>, %arg2: memref<8x1xf32, #tpu.memory_space<vmem>>, %arg3: memref<1x1x8xf32, #tpu.memory_space<vmem>>) attributes {dimension_semantics = [#tpu.dimension_semantics<parallel>], iteration_bounds = array<i64: 1>, scalar_prefetch = 0 : i64, scratch_operands = 0 : i64, tpu.core_type = #tpu.core_type<tc>, window_params = [{transform_indices = @transform_0, window_bounds = array<i64: 8, 8>}, {pipeline_mode = #tpu.pipeline_mode<synchronous>, transform_indices = @transform_1, window_bounds = array<i64: 8, 1>}, {transform_indices = @transform_2, window_bounds = array<i64: 1, 1, 8>}]} {
    %c0 = arith.constant 0 : index
    %c0_0 = arith.constant 0 : index
    %0 = vector.load %arg1[%c0, %c0_0] : memref<8x8xf32, #tpu.memory_space<vmem>>, vector<8x8xf32>
    %c8_i32 = arith.constant 8 : i32
    %1 = arith.muli %arg0, %c8_i32 : i32
    %2 = tpu.assume_multiple %1, 8 : i32
    %3 = arith.index_cast %2 : i32 to index
    %c0_1 = arith.constant 0 : index
    %4 = vector.load %arg2[%3, %c0_1] : memref<8x1xf32, #tpu.memory_space<vmem>>, vector<8x1xf32>
    %5 = vector.broadcast %4 : vector<8x1xf32> to vector<8x8xf32>
    %6 = arith.subf %5, %0 : vector<8x8xf32>
    %cst = arith.constant 0.000000e+00 : f32
    %7 = vector.broadcast %cst : f32 to vector<8x8xf32>
    %8 = arith.minimumf %6, %7 : vector<8x8xf32>
    %9 = math.absf %6 : vector<8x8xf32>
    %cst_2 = arith.constant 0.000000e+00 : f32
    %10 = vector.broadcast %cst_2 : f32 to vector<8x8xf32>
    %11 = arith.subf %10, %9 : vector<8x8xf32>
    %12 = math.exp %11 : vector<8x8xf32>
    %13 = math.log1p %12 : vector<8x8xf32>
    %14 = arith.subf %8, %13 : vector<8x8xf32>
    %cst_3 = arith.constant dense<0.000000e+00> : vector<8xf32>
    %15 = vector.multi_reduction <add>, %14, %cst_3 [0] : vector<8x8xf32> to vector<8xf32>
    %16 = vector.shape_cast %15 : vector<8xf32> to vector<1x8xf32>
    %17 = vector.shape_cast %16 : vector<1x8xf32> to vector<1x1x8xf32>
    %c0_4 = arith.constant 0 : index
    %c0_5 = arith.constant 0 : index
    %c0_6 = arith.constant 0 : index
    %18 = vector.load %arg3[%c0_4, %c0_5, %c0_6] : memref<1x1x8xf32, #tpu.memory_space<vmem>>, vector<1x1x8xf32>
    tpu.vector_store %arg3[%c0_4, %c0_5, %c0_6], %17 {strides = array<i32>} : memref<1x1x8xf32, #tpu.memory_space<vmem>>, vector<1x1x8xf32>,
    return
  }
  func.func @transform_0(%arg0: i32) -> (i32, i32) {
    %c0_i32 = arith.constant 0 : i32
    %c0_i32_0 = arith.constant 0 : i32
    return %arg0, %c0_i32 : i32, i32
  }
  func.func @transform_1(%arg0: i32) -> (i32, i32) {
    %c0_i32 = arith.constant 0 : i32
    %c0_i32_0 = arith.constant 0 : i32
    %c0_i32_1 = arith.constant 0 : i32
    return %c0_i32, %c0_i32_0 : i32, i32
  }
  func.func @transform_2(%arg0: i32) -> (i32, i32, i32) {
    %c0_i32 = arith.constant 0 : i32
    %c0_i32_0 = arith.constant 0 : i32
    %c0_i32_1 = arith.constant 0 : i32
    return %arg0, %c0_i32, %c0_i32_0 : i32, i32, i32
  }
}

</mosaic_0001>

<llo_original>
// kernel: tpu_custom_call.1
$region0: #{tpu_custom_call.1}
  #allocation0 [shape = 'u32[]', space=smem, size = 0x4, offset = 0x4, fixed_abs, tag = 'smem constant byte address 0x4 - core index']
  #allocation1 [shape = 'u32[144,128]{1,0:T(1,128)}', space=vmem, size = 0x12000, scoped, tag = 'internal scratch']
  %s0 = inlined_call_operand.vmem [shape: f32[8,8], index: 0, kind: input, shape index: {}]
  %s1 = inlined_call_operand.vmem [shape: f32[8,1], index: 1, kind: input, shape index: {}]
  %s2 = inlined_call_operand.hbm [shape: f32[1,1,8], index: 2, kind: output, shape index: {}]
  %s3 = sld [smem:[#allocation0]]
  $region18: #{tpu_custom_call.1} parent=0
    _
  %s5 = ssub.s32 1, %s3
  %s6 = scalar_select 0, %s5, %s3
  $region1: #{tpu_custom_call.1} parent=0
    #allocation2 [shape = 'u8[512]{0}', space=vmem, size = 0x400, scoped, tag = 'output window, operand 0, single buffered']
    #allocation3 [shape = 's32[1]{0}', space=sflag, size = 0x4, scoped, tag = 'scoped memory for tpu_custom_call.1']
    %7 = vsyncpa [#allocation3], 0
    // Predicated region
    $region2: #{tpu_custom_call.1} parent=1 // pred_check
      _
    $region3: #{tpu_custom_call.1} parent=1 // pred_check_branch
      %9 = sbr.rel (0) target = $region5
    $region4: #{tpu_custom_call.1} parent=1 // pred_region
      _
    $region5: #{tpu_custom_call.1} parent=1 // pred_fallthru
      _
    // Predicated region
    $region6: #{tpu_custom_call.1} parent=1 // pred_check
      _
    $region7: #{tpu_custom_call.1} parent=1 // pred_check_branch
      %11 = sbr.rel (0) target = $region9
    $region8: #{tpu_custom_call.1} parent=1 // pred_region
      _
    $region9: #{tpu_custom_call.1} parent=1 // pred_fallthru
      _
    %v12 = vld [vmem:[%s0] sm:$0xff]
    %s13 = smul.u32 0, 8
    %s14 = scalar_lea.vmem %s1, %s13
    %v15 = vld [vmem:[%s14] sm:$0xff]
    %17 = vset.pattern.permute.xlu0 0
    %18 = vperm.xlu0 %17, %v15
    %v19 = vpop.permute.xlu0 %18
    %v21 = vsub.f32 %v19, %v12
    %v22 = vmin.f32 %v21, 0.0
    %v23 = vand.u32 2147483647, %v21
    %v24 = vsub.f32 0.0, %v23
    %v25 = vmul.f32 %v24, 1.442695
    %v26 = vpow.pop %v25
    %v27 = vadd.f32 %v26, 1.0
    %v28 = vlog2.pop %v27
    %v29 = vmul.f32 %v28, 0.6931472
    %v30 = vmul.f32 -0.5, %v26
    %v31 = vadd.f32 %v30, 1.0
    %v32 = vmul.f32 %v31, %v26
    %v33 = vand.u32 2147483647, %v26
    %vm34 = vcmp.lt.f32.partialorder %v33, 0.0004427343
    %v35 = vsel %vm34, %v32, %v29
    %v36 = vsub.f32 %v22, %v35
    %vm37 = vcmask 64512
    %v38 = vsel %vm37, %v36, 0.0
    %v39 = vrot.slane %v38, 4
    %v40 = vadd.f32 %v38, %v39
    %v41 = vrot.slane %v40, 2
    %v42 = vadd.f32 %v40, %v41
    %v43 = vrot.slane %v42, 1
    %v44 = vadd.f32 %v42, %v43
    %vm45 = vcmask 57344
    %46 = vst.msk [vmem:[#allocation2] sm:$0x1] %vm45, %v44
    // Predicated region
    $region10: #{tpu_custom_call.1} parent=1 // pred_check
      _
    $region11: #{tpu_custom_call.1} parent=1 // pred_check_branch
      %48 = sbr.rel (0) target = $region13
    $region12: #{tpu_custom_call.1} parent=1 // pred_region
      %s50 = ssub.s32 16, 16
      %51 = vsyncadd [#allocation3], %s50
      %s53 = sshll.u32 [#allocation2], 4
      %s54 = int_to_ptr.vmem [resolvable:$true] %s53
      %56 = dma.vmem_to_hbm [thread:$0]  %s54, 16, %s2, [#allocation3]
    $region13: #{tpu_custom_call.1} parent=1 // pred_fallthru
      _
    // Predicated region
    $region14: #{tpu_custom_call.1} parent=1 // pred_check
      _
    $region15: #{tpu_custom_call.1} parent=1 // pred_check_branch
      %58 = sbr.rel (0) target = $region17
    $region16: #{tpu_custom_call.1} parent=1 // pred_region
      %59 = dma.done [#allocation3], 16
    $region17: #{tpu_custom_call.1} parent=1 // pred_fallthru
      _
    %60 = vsyncpa [#allocation3], 1

</llo_original>
